<compile_context>
chip_gen: v7x
topology: tpu7x:2x2x1
jax: 0.10.0
libtpu: 0.0.40
codegen_flags: <defaults>
</compile_context>

<pallas_src>
import functools
import math

import jax
import jax.numpy as jnp
from jax.experimental import pallas as pl
from jax.experimental.pallas import tpu as pltpu


def _round_up(x, mult):
    return ((x + mult - 1) // mult) * mult


def _conv_stats_kernel(w_ref, p_ref, y_ref, sum_ref, sumsq_ref):
    # w_ref: (Cp, Kp) resident weights, p_ref: (Kp, TM) patch tile,
    # y_ref: (Cp, TM) conv output tile,
    # sum_ref / sumsq_ref: (Cp, 1) grid-resident accumulators.
    @pl.when(pl.program_id(0) == 0)
    def _():
        sum_ref[...] = jnp.zeros_like(sum_ref)
        sumsq_ref[...] = jnp.zeros_like(sumsq_ref)

    y = jnp.dot(w_ref[...], p_ref[...],
                preferred_element_type=jnp.float32,
                precision=jax.lax.Precision.HIGHEST)
    y_ref[...] = y
    sum_ref[...] += jnp.sum(y, axis=-1, keepdims=True)
    sumsq_ref[...] += jnp.sum(y * y, axis=-1, keepdims=True)


def _bn_normalize_kernel(sum_ref, sumsq_ref, y_ref, o_ref, *, count, eps):
    s = sum_ref[...]                                   # (Cp, 1)
    ss = sumsq_ref[...]                                # (Cp, 1)
    mean = s * (1.0 / count)
    # unbiased variance, matches torch.var(unbiased=True)
    var = (ss - s * mean) * (1.0 / (count - 1.0))
    inv = 1.0 / (jnp.sqrt(var) + eps)                  # per-channel reciprocal
    o_ref[...] = (y_ref[...] - mean) * inv             # broadcast over lanes


def fused_conv_bn_forward(X, conv_weight, stride=1, eps=1e-3, *, tile_m=512):
    """Matches FusedConvBN2DFunction.forward semantics.
    X: [N, Cin, H, W] f32; conv_weight: [Cout, Cin, Kh, Kw] f32."""
    if stride < 1:
        stride = 1
    stride = int(stride)
    X = X.astype(jnp.float32)
    W = conv_weight.astype(jnp.float32)
    n, cin, h, w = X.shape
    cout, cin2, kh, kw = W.shape
    assert cin == cin2
    ho = (h - kh) // stride + 1
    wo = (w - kw) // stride + 1
    m = n * ho * wo
    k = cin * kh * kw

    # im2col (pure slicing / reshapes): patches[k_idx, m_idx],
    # k_idx = ci*Kh*Kw + kh*Kw + kw matches W.reshape(Cout, Cin*Kh*Kw) ordering.
    cols = []
    for ikh in range(kh):
        for ikw in range(kw):
            cols.append(
                X[:, :,
                  ikh:ikh + (ho - 1) * stride + 1:stride,
                  ikw:ikw + (wo - 1) * stride + 1:stride])      # [N, Cin, Ho, Wo]
    patches = jnp.stack(cols, axis=2)                           # [N, Cin, Kh*Kw, Ho, Wo]
    patches = patches.transpose(1, 2, 0, 3, 4).reshape(k, m)    # [K, M]
    w_mat = W.reshape(cout, k)                                  # [Cout, K]

    # Pad: lane axis (flattened batch*spatial) to a lane-dense tile multiple,
    # channel and contraction axes to sublane multiples of 8. Zero padding
    # leaves the matmul and the per-channel statistics unchanged.
    tile_m = max(128, (tile_m // 128) * 128)
    m_pad = _round_up(m, tile_m)
    k_pad = _round_up(k, 8)
    c_pad = _round_up(cout, 8)
    if m_pad != m or k_pad != k:
        patches = jnp.pad(patches, ((0, k_pad - k), (0, m_pad - m)))
    if c_pad != cout or k_pad != k:
        w_mat = jnp.pad(w_mat, ((0, c_pad - cout), (0, k_pad - k)))
    num_tiles = m_pad // tile_m

    vmem_limit = 48 * 1024 * 1024   # safe on v5e/v6e/v7x; usage here is far below it

    # --- Kernel 1: conv matmul + per-channel sum / sum-of-squares accumulation ---
    y_t, ch_sum, ch_sumsq = pl.pallas_call(
        _conv_stats_kernel,
        out_shape=(jax.ShapeDtypeStruct((c_pad, m_pad), jnp.float32),
                   jax.ShapeDtypeStruct((c_pad, 1), jnp.float32),
                   jax.ShapeDtypeStruct((c_pad, 1), jnp.float32)),
        grid_spec=pltpu.PrefetchScalarGridSpec(
            num_scalar_prefetch=0,
            grid=(num_tiles,),
            in_specs=[pl.BlockSpec((c_pad, k_pad), lambda i: (0, 0)),     # weights resident
                      pl.BlockSpec((k_pad, tile_m), lambda i: (0, i))],   # patch tile
            out_specs=(pl.BlockSpec((c_pad, tile_m), lambda i: (0, i)),   # conv output tile
                       pl.BlockSpec((c_pad, 1), lambda i: (0, 0)),        # sum accumulator
                       pl.BlockSpec((c_pad, 1), lambda i: (0, 0)))),      # sumsq accumulator
        compiler_params=pltpu.CompilerParams(
            dimension_semantics=("arbitrary",),     # stats accumulate across tiles
            vmem_limit_bytes=vmem_limit),
    )(w_mat, patches)

    # --- Kernel 2: batch-norm normalization with the finished statistics ---
    count = float(m)     # N in the PyTorch code: numel / channels
    norm_kernel = functools.partial(_bn_normalize_kernel, count=count, eps=float(eps))
    out_t = pl.pallas_call(
        norm_kernel,
        out_shape=jax.ShapeDtypeStruct((c_pad, m_pad), jnp.float32),
        grid_spec=pltpu.PrefetchScalarGridSpec(
            num_scalar_prefetch=0,
            grid=(num_tiles,),
            in_specs=[pl.BlockSpec((c_pad, 1), lambda i: (0, 0)),
                      pl.BlockSpec((c_pad, 1), lambda i: (0, 0)),
                      pl.BlockSpec((c_pad, tile_m), lambda i: (0, i))],
            out_specs=pl.BlockSpec((c_pad, tile_m), lambda i: (0, i))),
        compiler_params=pltpu.CompilerParams(
            dimension_semantics=("parallel",),
            vmem_limit_bytes=vmem_limit),
    )(ch_sum, ch_sumsq, y_t)

    out = out_t[:cout, :m].reshape(cout, n, ho, wo).transpose(1, 0, 2, 3)
    return out


def fused_conv_bn_module_forward(X, conv_weight, module_stride, module_eps, *, tile_m=512):
    # Faithfully replicate the module's positional argument swap:
    # stride slot <- module_eps (clamped to 1 since < 1), eps slot <- module_stride.
    return fused_conv_bn_forward(X, conv_weight, stride=module_eps, eps=module_stride,
                                 tile_m=tile_m)


if __name__ == "__main__":
    batch, in_channels, spatial = 2, 4, 16
    out_channels, kernel_size, stride, eps = 4, 3, 1, 1e-3

    key = jax.random.PRNGKey(0)
    kx, kw = jax.random.split(key)
    X = jax.random.normal(kx, (batch, in_channels, spatial, spatial), dtype=jnp.float32)
    # kaiming_uniform_(a=sqrt(5)) -> U(-1/sqrt(fan_in), 1/sqrt(fan_in))
    fan_in = in_channels * kernel_size * kernel_size
    bound = 1.0 / math.sqrt(fan_in)
    Wt = jax.random.uniform(kw, (out_channels, in_channels, kernel_size, kernel_size),
                            dtype=jnp.float32, minval=-bound, maxval=bound)

    y = fused_conv_bn_module_forward(X, Wt, module_stride=stride, module_eps=eps)
    jax.block_until_ready(y)

    # Pure-JAX reference with the same (swapped) forward semantics:
    # conv stride = 1 (eps < 1 clamps), batch-norm eps = module stride.
    conv_stride, bn_eps = 1, float(stride)
    Yc = jax.lax.conv_general_dilated(
        X, Wt, window_strides=(conv_stride, conv_stride), padding="VALID",
        dimension_numbers=("NCHW", "OIHW", "NCHW"),
        precision=jax.lax.Precision.HIGHEST)
    ch_sum = Yc.sum(axis=(0, 2, 3))
    ch_var = jnp.var(Yc, axis=(0, 2, 3), ddof=1)
    count = Yc.size / Yc.shape[1]
    mean = ch_sum / count
    denom = jnp.sqrt(ch_var) + bn_eps
    ref = (Yc - mean[None, :, None, None]) / denom[None, :, None, None]

    assert y.shape == ref.shape
    assert jnp.allclose(y, ref, atol=1e-3, rtol=1e-3), float(jnp.max(jnp.abs(y - ref)))

    print("KERNEL_OK")
</pallas_src>

<mosaic_0001>
module attributes {stable_mosaic.version = 11 : i64} {
  func.func @_conv_stats_kernel(%arg0: i32, %arg1: memref<8x40xf32, #tpu.memory_space<vmem>>, %arg2: memref<40x512xf32, #tpu.memory_space<vmem>>, %arg3: memref<8x512xf32, #tpu.memory_space<vmem>>, %arg4: memref<8x1xf32, #tpu.memory_space<vmem>>, %arg5: memref<8x1xf32, #tpu.memory_space<vmem>>) attributes {dimension_semantics = [#tpu.dimension_semantics<arbitrary>], iteration_bounds = array<i64: 1>, scalar_prefetch = 0 : i64, scratch_operands = 0 : i64, tpu.core_type = #tpu.core_type<tc>, window_params = [{pipeline_mode = #tpu.pipeline_mode<synchronous>, transform_indices = @transform_0, window_bounds = array<i64: 8, 40>}, {transform_indices = @transform_1, window_bounds = array<i64: 40, 512>}, {transform_indices = @transform_2, window_bounds = array<i64: 8, 512>}, {pipeline_mode = #tpu.pipeline_mode<synchronous>, transform_indices = @transform_3, window_bounds = array<i64: 8, 1>}, {pipeline_mode = #tpu.pipeline_mode<synchronous>, transform_indices = @transform_4, window_bounds = array<i64: 8, 1>}]} {
    %c0_i32 = arith.constant 0 : i32
    %0 = arith.cmpi eq, %arg0, %c0_i32 : i32
    %1 = arith.extui %0 : i1 to i32
    %c0_i32_0 = arith.constant 0 : i32
    %2 = arith.cmpi ne, %1, %c0_i32_0 : i32
    scf.if %2 {
      %cst_16 = arith.constant 0.000000e+00 : f32
      %18 = vector.broadcast %cst_16 : f32 to vector<8x1xf32>
      %c0_17 = arith.constant 0 : index
      %c0_18 = arith.constant 0 : index
      %19 = vector.load %arg4[%c0_17, %c0_18] : memref<8x1xf32, #tpu.memory_space<vmem>>, vector<8x1xf32>
      tpu.vector_store %arg4[%c0_17, %c0_18], %18 {strides = array<i32>} : memref<8x1xf32, #tpu.memory_space<vmem>>, vector<8x1xf32>,
      %cst_19 = arith.constant 0.000000e+00 : f32
      %20 = vector.broadcast %cst_19 : f32 to vector<8x1xf32>
      %c0_20 = arith.constant 0 : index
      %c0_21 = arith.constant 0 : index
      %21 = vector.load %arg5[%c0_20, %c0_21] : memref<8x1xf32, #tpu.memory_space<vmem>>, vector<8x1xf32>
      tpu.vector_store %arg5[%c0_20, %c0_21], %20 {strides = array<i32>} : memref<8x1xf32, #tpu.memory_space<vmem>>, vector<8x1xf32>,
    } else {
    }
    %c0 = arith.constant 0 : index
    %c0_1 = arith.constant 0 : index
    %3 = vector.load %arg1[%c0, %c0_1] : memref<8x40xf32, #tpu.memory_space<vmem>>, vector<8x40xf32>
    %c0_2 = arith.constant 0 : index
    %c0_3 = arith.constant 0 : index
    %4 = vector.load %arg2[%c0_2, %c0_3] : memref<40x512xf32, #tpu.memory_space<vmem>>, vector<40x512xf32>
    %cst = arith.constant dense<0.000000e+00> : vector<8x512xf32>
    %5 = tpu.matmul %3, %4, %cst {dimension_numbers = #tpu.dot_dimension_numbers<[1], [0], [0], [1], [0, 0, 1, 1], [], []>, precision = #tpu.contract_precision<fp32>} : vector<8x40xf32>, vector<40x512xf32>, vector<8x512xf32> -> vector<8x512xf32>
    %c0_4 = arith.constant 0 : index
    %c0_5 = arith.constant 0 : index
    %6 = vector.load %arg3[%c0_4, %c0_5] : memref<8x512xf32, #tpu.memory_space<vmem>>, vector<8x512xf32>
    tpu.vector_store %arg3[%c0_4, %c0_5], %5 {strides = array<i32>} : memref<8x512xf32, #tpu.memory_space<vmem>>, vector<8x512xf32>,
    %c0_6 = arith.constant 0 : index
    %c0_7 = arith.constant 0 : index
    %7 = vector.load %arg4[%c0_6, %c0_7] : memref<8x1xf32, #tpu.memory_space<vmem>>, vector<8x1xf32>
    %cst_8 = arith.constant dense<0.000000e+00> : vector<8xf32>
    %8 = vector.multi_reduction <add>, %5, %cst_8 [1] : vector<8x512xf32> to vector<8xf32>
    %9 = vector.shape_cast %8 : vector<8xf32> to vector<8x1xf32>
    %10 = arith.addf %7, %9 : vector<8x1xf32>
    %c0_9 = arith.constant 0 : index
    %c0_10 = arith.constant 0 : index
    %11 = vector.load %arg4[%c0_9, %c0_10] : memref<8x1xf32, #tpu.memory_space<vmem>>, vector<8x1xf32>
    tpu.vector_store %arg4[%c0_9, %c0_10], %10 {strides = array<i32>} : memref<8x1xf32, #tpu.memory_space<vmem>>, vector<8x1xf32>,
    %c0_11 = arith.constant 0 : index
    %c0_12 = arith.constant 0 : index
    %12 = vector.load %arg5[%c0_11, %c0_12] : memref<8x1xf32, #tpu.memory_space<vmem>>, vector<8x1xf32>
    %13 = arith.mulf %5, %5 : vector<8x512xf32>
    %cst_13 = arith.constant dense<0.000000e+00> : vector<8xf32>
    %14 = vector.multi_reduction <add>, %13, %cst_13 [1] : vector<8x512xf32> to vector<8xf32>
    %15 = vector.shape_cast %14 : vector<8xf32> to vector<8x1xf32>
    %16 = arith.addf %12, %15 : vector<8x1xf32>
    %c0_14 = arith.constant 0 : index
    %c0_15 = arith.constant 0 : index
    %17 = vector.load %arg5[%c0_14, %c0_15] : memref<8x1xf32, #tpu.memory_space<vmem>>, vector<8x1xf32>
    tpu.vector_store %arg5[%c0_14, %c0_15], %16 {strides = array<i32>} : memref<8x1xf32, #tpu.memory_space<vmem>>, vector<8x1xf32>,
    return
  }
  func.func @transform_0(%arg0: i32) -> (i32, i32) {
    %c0_i32 = arith.constant 0 : i32
    %c0_i32_0 = arith.constant 0 : i32
    %c0_i32_1 = arith.constant 0 : i32
    return %c0_i32, %c0_i32_0 : i32, i32
  }
  func.func @transform_1(%arg0: i32) -> (i32, i32) {
    %c0_i32 = arith.constant 0 : i32
    %c0_i32_0 = arith.constant 0 : i32
    return %c0_i32, %arg0 : i32, i32
  }
  func.func @transform_2(%arg0: i32) -> (i32, i32) {
    %c0_i32 = arith.constant 0 : i32
    %c0_i32_0 = arith.constant 0 : i32
    return %c0_i32, %arg0 : i32, i32
  }
  func.func @transform_3(%arg0: i32) -> (i32, i32) {
    %c0_i32 = arith.constant 0 : i32
    %c0_i32_0 = arith.constant 0 : i32
    %c0_i32_1 = arith.constant 0 : i32
    return %c0_i32, %c0_i32_0 : i32, i32
  }
  func.func @transform_4(%arg0: i32) -> (i32, i32) {
    %c0_i32 = arith.constant 0 : i32
    %c0_i32_0 = arith.constant 0 : i32
    %c0_i32_1 = arith.constant 0 : i32
    return %c0_i32, %c0_i32_0 : i32, i32
  }
}

</mosaic_0001>

<llo_original>
// kernel: tpu_custom_call.1
$region0: #{tpu_custom_call.1}
  #allocation0 [shape = 'u32[]', space=smem, size = 0x4, offset = 0x4, fixed_abs, tag = 'smem constant byte address 0x4 - core index']
  #allocation1 [shape = 'u32[144,128]{1,0:T(1,128)}', space=vmem, size = 0x12000, scoped, tag = 'internal scratch']
  %s0 = inlined_call_operand.hbm [shape: f32[8,40], index: 0, kind: input, shape index: {}]
  %s1 = inlined_call_operand.hbm [shape: f32[40,512], index: 1, kind: input, shape index: {}]
  %s2 = inlined_call_operand.hbm [shape: f32[8,512], index: 2, kind: output, shape index: {0}]
  %s3 = inlined_call_operand.vmem [shape: f32[8,1], index: 3, kind: output, shape index: {1}]
  %s4 = inlined_call_operand.vmem [shape: f32[8,1], index: 4, kind: output, shape index: {2}]
  %5 = xla_tuple %s2, %s3, %s4
  %s6 = sld [smem:[#allocation0]]
  $region46: #{tpu_custom_call.1} parent=0
    _
  %s8 = ssub.s32 1, %s6
  %s9 = scalar_select 0, %s8, %s6
  $region1: #{tpu_custom_call.1} parent=0
    #allocation2 [shape = 'u8[4096]{0}', space=vmem, size = 0x1000, scoped, tag = 'input window, operand 0, single buffered']
    #allocation3 [shape = 's32[1]{0}', space=sflag, size = 0x4, scoped, tag = 'scoped memory for tpu_custom_call.1']
    #allocation4 [shape = 's32[1]{0}', space=sflag, size = 0x4, scoped, tag = 'scoped memory for tpu_custom_call.1']
    #allocation5 [shape = 'u8[81920]{0}', space=vmem, size = 0x14000, scoped, tag = 'input window, operand 1, single buffered']
    #allocation6 [shape = 's32[1]{0}', space=sflag, size = 0x4, scoped, tag = 'scoped memory for tpu_custom_call.1']
    #allocation7 [shape = 'u8[16384]{0}', space=vmem, size = 0x4000, scoped, tag = 'output window, operand 0, single buffered']
    %10 = vsyncpa [#allocation3], 0
    %11 = vsyncpa [#allocation6], 0
    %12 = vsyncpa [#allocation4], 0
    // Predicated region
    $region2: #{tpu_custom_call.1} parent=1 // pred_check
      _
    $region3: #{tpu_custom_call.1} parent=1 // pred_check_branch
      %14 = sbr.rel (0) target = $region5
    $region4: #{tpu_custom_call.1} parent=1 // pred_region
      %s16 = ssub.s32 128, 128
      %17 = vsyncadd [#allocation3], %s16
      %s19 = sshll.u32 [#allocation2], 4
      %s20 = int_to_ptr.vmem [resolvable:$true] %s19
      %22 = dma.hbm_to_vmem [thread:$0]  %s0, 128, %s20, [#allocation3]
    $region5: #{tpu_custom_call.1} parent=1 // pred_fallthru
      _
    // Predicated region
    $region6: #{tpu_custom_call.1} parent=1 // pred_check
      _
    $region7: #{tpu_custom_call.1} parent=1 // pred_check_branch
      %24 = sbr.rel (0) target = $region9
    $region8: #{tpu_custom_call.1} parent=1 // pred_region
      %s26 = ssub.s32 2560, 2560
      %27 = vsyncadd [#allocation6], %s26
      %s28 = sshll.u32 [#allocation5], 4
      %s29 = int_to_ptr.vmem [resolvable:$true] %s28
      %34 = dma.hbm_to_vmem [thread:$0]  %s1, 2560, %s29, [#allocation6], 512, 512, 32
    $region9: #{tpu_custom_call.1} parent=1 // pred_fallthru
      _
    // Predicated region
    $region10: #{tpu_custom_call.1} parent=1 // pred_check
      _
    $region11: #{tpu_custom_call.1} parent=1 // pred_check_branch
      %36 = sbr.rel (0) target = $region13
    $region12: #{tpu_custom_call.1} parent=1 // pred_region
      %37 = dma.done [#allocation3], 128
    $region13: #{tpu_custom_call.1} parent=1 // pred_fallthru
      _
    // Predicated region
    $region14: #{tpu_custom_call.1} parent=1 // pred_check
      _
    $region15: #{tpu_custom_call.1} parent=1 // pred_check_branch
      %39 = sbr.rel (0) target = $region17
    $region16: #{tpu_custom_call.1} parent=1 // pred_region
      %40 = dma.done [#allocation6], 2560
    $region17: #{tpu_custom_call.1} parent=1 // pred_fallthru
      _
    %p41 = scmp.eq.s32.totalorder 0, 0
    // Predicated region
    $region18: #{tpu_custom_call.1} parent=1 // pred_check
      %p42 = pneg %p41
    $region19: #{tpu_custom_call.1} parent=1 // pred_check_branch
      %44 = sbr.rel (%p42) target = $region21
    $region20: #{tpu_custom_call.1} parent=1 // pred_region
      %vm45 = vcmask 7168
      %46 = vst.msk [vmem:[%s3] sm:$0xff] %vm45, 0.0
      %47 = vst.msk [vmem:[%s4] sm:$0xff] %vm45, 0.0
    $region21: #{tpu_custom_call.1} parent=1 // pred_fallthru
      _
    %v48 = vld [vmem:[#allocation2] sm:$0xff]
    %v49 = vld [vmem:[#allocation5] sm:$0xff]
    %v50 = vld [vmem:[#allocation5 + $0x8] sm:$0xff]
    %v51 = vld [vmem:[#allocation5 + $0x10] sm:$0xff]
    %v52 = vld [vmem:[#allocation5 + $0x18] sm:$0xff]
    %v53 = vld [vmem:[#allocation5 + $0x20] sm:$0xff]
    %v54 = vld [vmem:[#allocation5 + $0x28] sm:$0xff]
    %v55 = vld [vmem:[#allocation5 + $0x30] sm:$0xff]
    %v56 = vld [vmem:[#allocation5 + $0x38] sm:$0xff]
    %v57 = vld [vmem:[#allocation5 + $0x40] sm:$0xff]
    %v58 = vld [vmem:[#allocation5 + $0x48] sm:$0xff]
    %v59 = vld [vmem:[#allocation5 + $0x50] sm:$0xff]
    %v60 = vld [vmem:[#allocation5 + $0x58] sm:$0xff]
    %v61 = vld [vmem:[#allocation5 + $0x60] sm:$0xff]
    %v62 = vld [vmem:[#allocation5 + $0x68] sm:$0xff]
    %v63 = vld [vmem:[#allocation5 + $0x70] sm:$0xff]
    %v64 = vld [vmem:[#allocation5 + $0x78] sm:$0xff]
    %v65 = vld [vmem:[#allocation5 + $0x80] sm:$0xff]
    %v66 = vld [vmem:[#allocation5 + $0x88] sm:$0xff]
    %v67 = vld [vmem:[#allocation5 + $0x90] sm:$0xff]
    %v68 = vld [vmem:[#allocation5 + $0x98] sm:$0xff]
    %vm69 = vcmask 326656
    %v71 = vsel %vm69, %v48, 0
    %v73 = vand.u32 %v50, 4294901760
    %74 = vmatprep.subr.mxu0 %v73
    %v75 = vand.u32 %v49, 4294901760
    %76 = vmatpush1.msra.mxu0 %v75
    %v77 = vand.u32 %v54, 4294901760
    %78 = vmatprep.subr.mxu0 %v77
    %v79 = vand.u32 %v53, 4294901760
    %80 = vmatpush1.msra.mxu0 %v79
    %v81 = vand.u32 %v58, 4294901760
    %82 = vmatprep.subr.mxu0 %v81
    %v83 = vand.u32 %v57, 4294901760
    %84 = vmatpush1.msra.mxu0 %v83
    %v85 = vand.u32 %v62, 4294901760
    %86 = vmatprep.subr.mxu0 %v85
    %v87 = vand.u32 %v61, 4294901760
    %88 = vmatpush1.msra.mxu0 %v87
    %v89 = vand.u32 %v66, 4294901760
    %90 = vmatprep.subr.mxu0 %v89
    %v91 = vand.u32 %v65, 4294901760
    %92 = vmatpush1.msra.mxu0 %v91
    %93 = vmatprep.subr.mxu0 0.0
    %94 = vmatpush1.msra.mxu0 0.0
    %95 = vmatprep.subr.mxu0 0.0
    %96 = vmatpush1.msra.mxu0 0.0
    %97 = vmatprep.subr.mxu0 0.0
    %98 = vmatpush1.msra.mxu0 0.0
    %99 = vmatprep.subr.mxu0 0.0
    %100 = vmatpush1.msra.mxu0 0.0
    %101 = vmatprep.subr.mxu0 0.0
    %102 = vmatpush1.msra.mxu0 0.0
    %103 = vmatprep.subr.mxu0 0.0
    %104 = vmatpush1.msra.mxu0 0.0
    %105 = vmatprep.subr.mxu0 0.0
    %106 = vmatpush1.msra.mxu0 0.0
    %107 = vmatprep.subr.mxu0 0.0
    %108 = vmatpush1.msra.mxu0 0.0
    %109 = vmatprep.subr.mxu0 0.0
    %110 = vmatpush1.msra.mxu0 0.0
    %111 = vmatprep.subr.mxu0 0.0
    %112 = vmatpush1.msra.mxu0 0.0
    %113 = vmatprep.subr.mxu0 0.0
    %114 = vmatpush1.msra.mxu0 0.0
    %115 = vmatprep.subr.mxu0 0.0
    %116 = vmatpush1.msra.mxu0 0.0
    %117 = vmatprep.subr.mxu0 0.0
    %118 = vmatpush1.msra.mxu0 0.0
    %119 = vmatprep.subr.mxu0 0.0
    %120 = vmatpush1.msra.mxu0 0.0
    %121 = vmatprep.subr.mxu0 0.0
    %122 = vmatpush1.msra.mxu0 0.0
    %123 = vmatprep.subr.mxu0 0.0
    %124 = vmatpush1.msra.mxu0 0.0
    %125 = vmatprep.subr.mxu0 0.0
    %126 = vmatpush1.msra.mxu0 0.0
    %127 = vmatprep.subr.mxu0 0.0
    %128 = vmatpush1.msra.mxu0 0.0
    %129 = vmatprep.subr.mxu0 0.0
    %130 = vmatpush1.msra.mxu0 0.0
    %131 = vmatprep.subr.mxu0 0.0
    %132 = vmatpush1.msra.mxu0 0.0
    %133 = vmatprep.subr.mxu0 0.0
    %134 = vmatpush1.msra.mxu0 0.0
    %135 = vmatprep.subr.mxu0 0.0
    %136 = vmatpush1.msra.mxu0 0.0
    %137 = vmatprep.subr.mxu0 0.0
    %138 = vmatpush1.msra.mxu0 0.0
    %139 = vmatprep.subr.mxu0 0.0
    %140 = vmatpush1.msra.mxu0 0.0
    %141 = vmatprep.subr.mxu0 0.0
    %142 = vmatpush1.msra.mxu0 0.0
    %143 = vmatprep.subr.mxu0 0.0
    %144 = vmatpush1.msra.mxu0 0.0
    %145 = vmatprep.subr.mxu0 0.0
    %146 = vmatpush1.msra.mxu0 0.0
    %147 = vmatprep.mubr.f32.mxu0 0.0
    %v148 = vand.u32 %v71, 4294901760
    %v149 = vsub.f32 %v71, %v148
    %v150 = vand.u32 %v149, 4294901760
    %v151 = vsub.f32 %v149, %v150
    %v152 = vand.u32 %v151, 4294901760
    %153 = vmatmul.mubr.f32.gmra.mrb[0].mxu0 %v152
    %v154 = vpop.f32.mrb[0].mxu0
    %v155 = vadd.f32 0.0, %v154
    %v156 = vpop.f32.mrb[0].mxu0
    %v157 = vadd.f32 0.0, %v156
    %158 = vdwg.mxu0
    %v159 = vand.u32 %v50, 4294901760
    %v160 = vsub.f32 %v50, %v159
    %v161 = vand.u32 %v160, 4294901760
    %v162 = vsub.f32 %v160, %v161
    %v163 = vand.u32 %v162, 4294901760
    %164 = vmatprep.subr.mxu0 %v163
    %v165 = vand.u32 %v49, 4294901760
    %v166 = vsub.f32 %v49, %v165
    %v167 = vand.u32 %v166, 4294901760
    %v168 = vsub.f32 %v166, %v167
    %v169 = vand.u32 %v168, 4294901760
    %170 = vmatpush1.msra.mxu0 %v169
    %v171 = vand.u32 %v54, 4294901760
    %v172 = vsub.f32 %v54, %v171
    %v173 = vand.u32 %v172, 4294901760
    %v174 = vsub.f32 %v172, %v173
    %v175 = vand.u32 %v174, 4294901760
    %176 = vmatprep.subr.mxu0 %v175
    %v177 = vand.u32 %v53, 4294901760
    %v178 = vsub.f32 %v53, %v177
    %v179 = vand.u32 %v178, 4294901760
    %v180 = vsub.f32 %v178, %v179
    %v181 = vand.u32 %v180, 4294901760
    %182 = vmatpush1.msra.mxu0 %v181
    %v183 = vand.u32 %v58, 4294901760
    %v184 = vsub.f32 %v58, %v183
    %v185 = vand.u32 %v184, 4294901760
    %v186 = vsub.f32 %v184, %v185
    %v187 = vand.u32 %v186, 4294901760
    %188 = vmatprep.subr.mxu0 %v187
    %v189 = vand.u32 %v57, 4294901760
    %v190 = vsub.f32 %v57, %v189
    %v191 = vand.u32 %v190, 4294901760
    %v192 = vsub.f32 %v190, %v191
    %v193 = vand.u32 %v192, 4294901760
    %194 = vmatpush1.msra.mxu0 %v193
    %v195 = vand.u32 %v62, 4294901760
    %v196 = vsub.f32 %v62, %v195
    %v197 = vand.u32 %v196, 4294901760
    %v198 = vsub.f32 %v196, %v197
    %v199 = vand.u32 %v198, 4294901760
    %200 = vmatprep.subr.mxu0 %v199
    %v201 = vand.u32 %v61, 4294901760
    %v202 = vsub.f32 %v61, %v201
    %v203 = vand.u32 %v202, 4294901760
    %v204 = vsub.f32 %v202, %v203
    %v205 = vand.u32 %v204, 4294901760
    %206 = vmatpush1.msra.mxu0 %v205
    %v207 = vand.u32 %v66, 4294901760
    %v208 = vsub.f32 %v66, %v207
    %v209 = vand.u32 %v208, 4294901760
    %v210 = vsub.f32 %v208, %v209
    %v211 = vand.u32 %v210, 4294901760
    %212 = vmatprep.subr.mxu0 %v211
    %v213 = vand.u32 %v65, 4294901760
    %v214 = vsub.f32 %v65, %v213
    %v215 = vand.u32 %v214, 4294901760
    %v216 = vsub.f32 %v214, %v215
    %v217 = vand.u32 %v216, 4294901760
    %218 = vmatpush1.msra.mxu0 %v217
    %219 = vmatprep.subr.mxu0 0.0
    %220 = vmatpush1.msra.mxu0 0.0
    %221 = vmatprep.subr.mxu0 0.0
    %222 = vmatpush1.msra.mxu0 0.0
    %223 = vmatprep.subr.mxu0 0.0
    %224 = vmatpush1.msra.mxu0 0.0
    %225 = vmatprep.subr.mxu0 0.0
    %226 = vmatpush1.msra.mxu0 0.0
    %227 = vmatprep.subr.mxu0 0.0
    %228 = vmatpush1.msra.mxu0 0.0
    %229 = vmatprep.subr.mxu0 0.0
    %230 = vmatpush1.msra.mxu0 0.0
    %231 = vmatprep.subr.mxu0 0.0
    %232 = vmatpush1.msra.mxu0 0.0
    %233 = vmatprep.subr.mxu0 0.0
    %234 = vmatpush1.msra.mxu0 0.0
    %235 = vmatprep.subr.mxu0 0.0
    %236 = vmatpush1.msra.mxu0 0.0
    %237 = vmatprep.subr.mxu0 0.0
    %238 = vmatpush1.msra.mxu0 0.0
    %239 = vmatprep.subr.mxu0 0.0
    %240 = vmatpush1.msra.mxu0 0.0
    %241 = vmatprep.subr.mxu0 0.0
    %242 = vmatpush1.msra.mxu0 0.0
    %243 = vmatprep.subr.mxu0 0.0
    %244 = vmatpush1.msra.mxu0 0.0
    %245 = vmatprep.subr.mxu0 0.0
    %246 = vmatpush1.msra.mxu0 0.0
    %247 = vmatprep.subr.mxu0 0.0
    %248 = vmatpush1.msra.mxu0 0.0
    %249 = vmatprep.subr.mxu0 0.0
    %250 = vmatpush1.msra.mxu0 0.0
    %251 = vmatprep.subr.mxu0 0.0
    %252 = vmatpush1.msra.mxu0 0.0
    %253 = vmatprep.subr.mxu0 0.0
    %254 = vmatpush1.msra.mxu0 0.0
    %255 = vmatprep.subr.mxu0 0.0
    %256 = vmatpush1.msra.mxu0 0.0
    %257 = vmatprep.subr.mxu0 0.0
    %258 = vmatpush1.msra.mxu0 0.0
    %259 = vmatprep.subr.mxu0 0.0
    %260 = vmatpush1.msra.mxu0 0.0
    %261 = vmatprep.subr.mxu0 0.0
    %262 = vmatpush1.msra.mxu0 0.0
    %263 = vmatprep.subr.mxu0 0.0
    %264 = vmatpush1.msra.mxu0 0.0
    %265 = vmatprep.subr.mxu0 0.0
    %266 = vmatpush1.msra.mxu0 0.0
    %267 = vmatprep.subr.mxu0 0.0
    %268 = vmatpush1.msra.mxu0 0.0
    %269 = vmatprep.subr.mxu0 0.0
    %270 = vmatpush1.msra.mxu0 0.0
    %271 = vmatprep.subr.mxu0 0.0
    %272 = vmatpush1.msra.mxu0 0.0
    %273 = vmatprep.mubr.f32.mxu0 0.0
    %v274 = vand.u32 %v71, 4294901760
    %275 = vmatmul.mubr.f32.gmra.mrb[0].mxu0 %v274
    %v276 = vpop.f32.mrb[0].mxu0
    %v277 = vadd.f32 %v155, %v276
    %v278 = vpop.f32.mrb[0].mxu0
    %v279 = vadd.f32 %v157, %v278
    %280 = vdwg.mxu0
    %v281 = vand.u32 %v50, 4294901760
    %v282 = vsub.f32 %v50, %v281
    %283 = vmatprep.subr.mxu0 %v282
    %v284 = vand.u32 %v49, 4294901760
    %v285 = vsub.f32 %v49, %v284
    %286 = vmatpush1.msra.mxu0 %v285
    %v287 = vand.u32 %v54, 4294901760
    %v288 = vsub.f32 %v54, %v287
    %289 = vmatprep.subr.mxu0 %v288
    %v290 = vand.u32 %v53, 4294901760
    %v291 = vsub.f32 %v53, %v290
    %292 = vmatpush1.msra.mxu0 %v291
    %v293 = vand.u32 %v58, 4294901760
    %v294 = vsub.f32 %v58, %v293
    %295 = vmatprep.subr.mxu0 %v294
    %v296 = vand.u32 %v57, 4294901760
    %v297 = vsub.f32 %v57, %v296
    %298 = vmatpush1.msra.mxu0 %v297
    %v299 = vand.u32 %v62, 4294901760
    %v300 = vsub.f32 %v62, %v299
    %301 = vmatprep.subr.mxu0 %v300
    %v302 = vand.u32 %v61, 4294901760
    %v303 = vsub.f32 %v61, %v302
    %304 = vmatpush1.msra.mxu0 %v303
    %v305 = vand.u32 %v66, 4294901760
    %v306 = vsub.f32 %v66, %v305
    %307 = vmatprep.subr.mxu0 %v306
    %v308 = vand.u32 %v65, 4294901760
    %v309 = vsub.f32 %v65, %v308
    %310 = vmatpush1.msra.mxu0 %v309
    %311 = vmatprep.subr.mxu0 0.0
    %312 = vmatpush1.msra.mxu0 0.0
    %313 = vmatprep.subr.mxu0 0.0
    %314 = vmatpush1.msra.mxu0 0.0
    %315 = vmatprep.subr.mxu0 0.0
    %316 = vmatpush1.msra.mxu0 0.0
    %317 = vmatprep.subr.mxu0 0.0
    %318 = vmatpush1.msra.mxu0 0.0
    %319 = vmatprep.subr.mxu0 0.0
    %320 = vmatpush1.msra.mxu0 0.0
    %321 = vmatprep.subr.mxu0 0.0
    %322 = vmatpush1.msra.mxu0 0.0
    %323 = vmatprep.subr.mxu0 0.0
    %324 = vmatpush1.msra.mxu0 0.0
    %325 = vmatprep.subr.mxu0 0.0
    %326 = vmatpush1.msra.mxu0 0.0
    %327 = vmatprep.subr.mxu0 0.0
    %328 = vmatpush1.msra.mxu0 0.0
    %329 = vmatprep.subr.mxu0 0.0
    %330 = vmatpush1.msra.mxu0 0.0
    %331 = vmatprep.subr.mxu0 0.0
    %332 = vmatpush1.msra.mxu0 0.0
    %333 = vmatprep.subr.mxu0 0.0
    %334 = vmatpush1.msra.mxu0 0.0
    %335 = vmatprep.subr.mxu0 0.0
    %336 = vmatpush1.msra.mxu0 0.0
    %337 = vmatprep.subr.mxu0 0.0
    %338 = vmatpush1.msra.mxu0 0.0
    %339 = vmatprep.subr.mxu0 0.0
    %340 = vmatpush1.msra.mxu0 0.0
    %341 = vmatprep.subr.mxu0 0.0
    %342 = vmatpush1.msra.mxu0 0.0
    %343 = vmatprep.subr.mxu0 0.0
    %344 = vmatpush1.msra.mxu0 0.0
    %345 = vmatprep.subr.mxu0 0.0
    %346 = vmatpush1.msra.mxu0 0.0
    %347 = vmatprep.subr.mxu0 0.0
    %348 = vmatpush1.msra.mxu0 0.0
    %349 = vmatprep.subr.mxu0 0.0
    %350 = vmatpush1.msra.mxu0 0.0
    %351 = vmatprep.subr.mxu0 0.0
    %352 = vmatpush1.msra.mxu0 0.0
    %353 = vmatprep.subr.mxu0 0.0
    %354 = vmatpush1.msra.mxu0 0.0
    %355 = vmatprep.subr.mxu0 0.0
    %356 = vmatpush1.msra.mxu0 0.0
    %357 = vmatprep.subr.mxu0 0.0
    %358 = vmatpush1.msra.mxu0 0.0
    %359 = vmatprep.subr.mxu0 0.0
    %360 = vmatpush1.msra.mxu0 0.0
    %361 = vmatprep.subr.mxu0 0.0
    %362 = vmatpush1.msra.mxu0 0.0
    %363 = vmatprep.subr.mxu0 0.0
    %364 = vmatpush1.msra.mxu0 0.0
    %365 = vmatprep.mubr.f32.mxu0 0.0
    %v366 = vand.u32 %v71, 4294901760
    %v367 = vsub.f32 %v71, %v366
    %368 = vmatmul.mubr.f32.gmra.mrb[0].mxu0 %v367
    %v369 = vpop.f32.mrb[0].mxu0
    %v370 = vadd.f32 %v277, %v369
    %v371 = vpop.f32.mrb[0].mxu0
    %v372 = vadd.f32 %v279, %v371
    %373 = vdwg.mxu0
    %v374 = vand.u32 %v50, 4294901760
    %375 = vmatprep.subr.mxu0 %v374
    %v376 = vand.u32 %v49, 4294901760
    %377 = vmatpush1.msra.mxu0 %v376
    %v378 = vand.u32 %v54, 4294901760
    %379 = vmatprep.subr.mxu0 %v378
    %v380 = vand.u32 %v53, 4294901760
    %381 = vmatpush1.msra.mxu0 %v380
    %v382 = vand.u32 %v58, 4294901760
    %383 = vmatprep.subr.mxu0 %v382
    %v384 = vand.u32 %v57, 4294901760
    %385 = vmatpush1.msra.mxu0 %v384
    %v386 = vand.u32 %v62, 4294901760
    %387 = vmatprep.subr.mxu0 %v386
    %v388 = vand.u32 %v61, 4294901760
    %389 = vmatpush1.msra.mxu0 %v388
    %v390 = vand.u32 %v66, 4294901760
    %391 = vmatprep.subr.mxu0 %v390
    %v392 = vand.u32 %v65, 4294901760
    %393 = vmatpush1.msra.mxu0 %v392
    %394 = vmatprep.subr.mxu0 0.0
    %395 = vmatpush1.msra.mxu0 0.0
    %396 = vmatprep.subr.mxu0 0.0
    %397 = vmatpush1.msra.mxu0 0.0
    %398 = vmatprep.subr.mxu0 0.0
    %399 = vmatpush1.msra.mxu0 0.0
    %400 = vmatprep.subr.mxu0 0.0
    %401 = vmatpush1.msra.mxu0 0.0
    %402 = vmatprep.subr.mxu0 0.0
    %403 = vmatpush1.msra.mxu0 0.0
    %404 = vmatprep.subr.mxu0 0.0
    %405 = vmatpush1.msra.mxu0 0.0
    %406 = vmatprep.subr.mxu0 0.0
    %407 = vmatpush1.msra.mxu0 0.0
    %408 = vmatprep.subr.mxu0 0.0
    %409 = vmatpush1.msra.mxu0 0.0
    %410 = vmatprep.subr.mxu0 0.0
    %411 = vmatpush1.msra.mxu0 0.0
    %412 = vmatprep.subr.mxu0 0.0
    %413 = vmatpush1.msra.mxu0 0.0
    %414 = vmatprep.subr.mxu0 0.0
    %415 = vmatpush1.msra.mxu0 0.0
    %416 = vmatprep.subr.mxu0 0.0
    %417 = vmatpush1.msra.mxu0 0.0
    %418 = vmatprep.subr.mxu0 0.0
    %419 = vmatpush1.msra.mxu0 0.0
    %420 = vmatprep.subr.mxu0 0.0
    %421 = vmatpush1.msra.mxu0 0.0
    %422 = vmatprep.subr.mxu0 0.0
    %423 = vmatpush1.msra.mxu0 0.0
    %424 = vmatprep.subr.mxu0 0.0
    %425 = vmatpush1.msra.mxu0 0.0
    %426 = vmatprep.subr.mxu0 0.0
    %427 = vmatpush1.msra.mxu0 0.0
    %428 = vmatprep.subr.mxu0 0.0
    %429 = vmatpush1.msra.mxu0 0.0
    %430 = vmatprep.subr.mxu0 0.0
    %431 = vmatpush1.msra.mxu0 0.0
    %432 = vmatprep.subr.mxu0 0.0
    %433 = vmatpush1.msra.mxu0 0.0
    %434 = vmatprep.subr.mxu0 0.0
    %435 = vmatpush1.msra.mxu0 0.0
    %436 = vmatprep.subr.mxu0 0.0
    %437 = vmatpush1.msra.mxu0 0.0
    %438 = vmatprep.subr.mxu0 0.0
    %439 = vmatpush1.msra.mxu0 0.0
    %440 = vmatprep.subr.mxu0 0.0
    %441 = vmatpush1.msra.mxu0 0.0
    %442 = vmatprep.subr.mxu0 0.0
    %443 = vmatpush1.msra.mxu0 0.0
    %444 = vmatprep.subr.mxu0 0.0
    %445 = vmatpush1.msra.mxu0 0.0
    %446 = vmatprep.subr.mxu0 0.0
    %447 = vmatpush1.msra.mxu0 0.0
    %448 = vmatprep.mubr.f32.mxu0 0.0
    %v449 = vand.u32 %v71, 4294901760
    %v450 = vsub.f32 %v71, %v449
    %v451 = vand.u32 %v450, 4294901760
    %452 = vmatmul.mubr.f32.gmra.mrb[0].mxu0 %v451
    %v453 = vpop.f32.mrb[0].mxu0
    %v454 = vadd.f32 %v370, %v453
    %v455 = vpop.f32.mrb[0].mxu0
    %v456 = vadd.f32 %v372, %v455
    %457 = vdwg.mxu0
    %v458 = vand.u32 %v50, 4294901760
    %v459 = vsub.f32 %v50, %v458
    %v460 = vand.u32 %v459, 4294901760
    %461 = vmatprep.subr.mxu0 %v460
    %v462 = vand.u32 %v49, 4294901760
    %v463 = vsub.f32 %v49, %v462
    %v464 = vand.u32 %v463, 4294901760
    %465 = vmatpush1.msra.mxu0 %v464
    %v466 = vand.u32 %v54, 4294901760
    %v467 = vsub.f32 %v54, %v466
    %v468 = vand.u32 %v467, 4294901760
    %469 = vmatprep.subr.mxu0 %v468
    %v470 = vand.u32 %v53, 4294901760
    %v471 = vsub.f32 %v53, %v470
    %v472 = vand.u32 %v471, 4294901760
    %473 = vmatpush1.msra.mxu0 %v472
    %v474 = vand.u32 %v58, 4294901760
    %v475 = vsub.f32 %v58, %v474
    %v476 = vand.u32 %v475, 4294901760
    %477 = vmatprep.subr.mxu0 %v476
    %v478 = vand.u32 %v57, 4294901760
    %v479 = vsub.f32 %v57, %v478
    %v480 = vand.u32 %v479, 4294901760
    %481 = vmatpush1.msra.mxu0 %v480
    %v482 = vand.u32 %v62, 4294901760
    %v483 = vsub.f32 %v62, %v482
    %v484 = vand.u32 %v483, 4294901760
    %485 = vmatprep.subr.mxu0 %v484
    %v486 = vand.u32 %v61, 4294901760
    %v487 = vsub.f32 %v61, %v486
    %v488 = vand.u32 %v487, 4294901760
    %489 = vmatpush1.msra.mxu0 %v488
    %v490 = vand.u32 %v66, 4294901760
    %v491 = vsub.f32 %v66, %v490
    %v492 = vand.u32 %v491, 4294901760
    %493 = vmatprep.subr.mxu0 %v492
    %v494 = vand.u32 %v65, 4294901760
    %v495 = vsub.f32 %v65, %v494
    %v496 = vand.u32 %v495, 4294901760
    %497 = vmatpush1.msra.mxu0 %v496
    %498 = vmatprep.subr.mxu0 0.0
    %499 = vmatpush1.msra.mxu0 0.0
    %500 = vmatprep.subr.mxu0 0.0
    %501 = vmatpush1.msra.mxu0 0.0
    %502 = vmatprep.subr.mxu0 0.0
    %503 = vmatpush1.msra.mxu0 0.0
    %504 = vmatprep.subr.mxu0 0.0
    %505 = vmatpush1.msra.mxu0 0.0
    %506 = vmatprep.subr.mxu0 0.0
    %507 = vmatpush1.msra.mxu0 0.0
    %508 = vmatprep.subr.mxu0 0.0
    %509 = vmatpush1.msra.mxu0 0.0
    %510 = vmatprep.subr.mxu0 0.0
    %511 = vmatpush1.msra.mxu0 0.0
    %512 = vmatprep.subr.mxu0 0.0
    %513 = vmatpush1.msra.mxu0 0.0
    %514 = vmatprep.subr.mxu0 0.0
    %515 = vmatpush1.msra.mxu0 0.0
    %516 = vmatprep.subr.mxu0 0.0
    %517 = vmatpush1.msra.mxu0 0.0
    %518 = vmatprep.subr.mxu0 0.0
    %519 = vmatpush1.msra.mxu0 0.0
    %520 = vmatprep.subr.mxu0 0.0
    %521 = vmatpush1.msra.mxu0 0.0
    %522 = vmatprep.subr.mxu0 0.0
    %523 = vmatpush1.msra.mxu0 0.0
    %524 = vmatprep.subr.mxu0 0.0
    %525 = vmatpush1.msra.mxu0 0.0
    %526 = vmatprep.subr.mxu0 0.0
    %527 = vmatpush1.msra.mxu0 0.0
    %528 = vmatprep.subr.mxu0 0.0
    %529 = vmatpush1.msra.mxu0 0.0
    %530 = vmatprep.subr.mxu0 0.0
    %531 = vmatpush1.msra.mxu0 0.0
    %532 = vmatprep.subr.mxu0 0.0
    %533 = vmatpush1.msra.mxu0 0.0
    %534 = vmatprep.subr.mxu0 0.0
    %535 = vmatpush1.msra.mxu0 0.0
    %536 = vmatprep.subr.mxu0 0.0
    %537 = vmatpush1.msra.mxu0 0.0
    %538 = vmatprep.subr.mxu0 0.0
    %539 = vmatpush1.msra.mxu0 0.0
    %540 = vmatprep.subr.mxu0 0.0
    %541 = vmatpush1.msra.mxu0 0.0
    %542 = vmatprep.subr.mxu0 0.0
    %543 = vmatpush1.msra.mxu0 0.0
    %544 = vmatprep.subr.mxu0 0.0
    %545 = vmatpush1.msra.mxu0 0.0
    %546 = vmatprep.subr.mxu0 0.0
    %547 = vmatpush1.msra.mxu0 0.0
    %548 = vmatprep.subr.mxu0 0.0
    %549 = vmatpush1.msra.mxu0 0.0
    %550 = vmatprep.subr.mxu0 0.0
    %551 = vmatpush1.msra.mxu0 0.0
    %552 = vmatprep.mubr.f32.mxu0 0.0
    %v553 = vand.u32 %v71, 4294901760
    %554 = vmatmul.mubr.f32.gmra.mrb[0].mxu0 %v553
    %v555 = vpop.f32.mrb[0].mxu0
    %v556 = vadd.f32 %v454, %v555
    %v557 = vpop.f32.mrb[0].mxu0
    %v558 = vadd.f32 %v456, %v557
    %559 = vdwg.mxu0
    %v560 = vand.u32 %v50, 4294901760
    %561 = vmatprep.subr.mxu0 %v560
    %v562 = vand.u32 %v49, 4294901760
    %563 = vmatpush1.msra.mxu0 %v562
    %v564 = vand.u32 %v54, 4294901760
    %565 = vmatprep.subr.mxu0 %v564
    %v566 = vand.u32 %v53, 4294901760
    %567 = vmatpush1.msra.mxu0 %v566
    %v568 = vand.u32 %v58, 4294901760
    %569 = vmatprep.subr.mxu0 %v568
    %v570 = vand.u32 %v57, 4294901760
    %571 = vmatpush1.msra.mxu0 %v570
    %v572 = vand.u32 %v62, 4294901760
    %573 = vmatprep.subr.mxu0 %v572
    %v574 = vand.u32 %v61, 4294901760
    %575 = vmatpush1.msra.mxu0 %v574
    %v576 = vand.u32 %v66, 4294901760
    %577 = vmatprep.subr.mxu0 %v576
    %v578 = vand.u32 %v65, 4294901760
    %579 = vmatpush1.msra.mxu0 %v578
    %580 = vmatprep.subr.mxu0 0.0
    %581 = vmatpush1.msra.mxu0 0.0
    %582 = vmatprep.subr.mxu0 0.0
    %583 = vmatpush1.msra.mxu0 0.0
    %584 = vmatprep.subr.mxu0 0.0
    %585 = vmatpush1.msra.mxu0 0.0
    %586 = vmatprep.subr.mxu0 0.0
    %587 = vmatpush1.msra.mxu0 0.0
    %588 = vmatprep.subr.mxu0 0.0
    %589 = vmatpush1.msra.mxu0 0.0
    %590 = vmatprep.subr.mxu0 0.0
    %591 = vmatpush1.msra.mxu0 0.0
    %592 = vmatprep.subr.mxu0 0.0
    %593 = vmatpush1.msra.mxu0 0.0
    %594 = vmatprep.subr.mxu0 0.0
    %595 = vmatpush1.msra.mxu0 0.0
    %596 = vmatprep.subr.mxu0 0.0
    %597 = vmatpush1.msra.mxu0 0.0
    %598 = vmatprep.subr.mxu0 0.0
    %599 = vmatpush1.msra.mxu0 0.0
    %600 = vmatprep.subr.mxu0 0.0
    %601 = vmatpush1.msra.mxu0 0.0
    %602 = vmatprep.subr.mxu0 0.0
    %603 = vmatpush1.msra.mxu0 0.0
    %604 = vmatprep.subr.mxu0 0.0
    %605 = vmatpush1.msra.mxu0 0.0
    %606 = vmatprep.subr.mxu0 0.0
    %607 = vmatpush1.msra.mxu0 0.0
    %608 = vmatprep.subr.mxu0 0.0
    %609 = vmatpush1.msra.mxu0 0.0
    %610 = vmatprep.subr.mxu0 0.0
    %611 = vmatpush1.msra.mxu0 0.0
    %612 = vmatprep.subr.mxu0 0.0
    %613 = vmatpush1.msra.mxu0 0.0
    %614 = vmatprep.subr.mxu0 0.0
    %615 = vmatpush1.msra.mxu0 0.0
    %616 = vmatprep.subr.mxu0 0.0
    %617 = vmatpush1.msra.mxu0 0.0
    %618 = vmatprep.subr.mxu0 0.0
    %619 = vmatpush1.msra.mxu0 0.0
    %620 = vmatprep.subr.mxu0 0.0
    %621 = vmatpush1.msra.mxu0 0.0
    %622 = vmatprep.subr.mxu0 0.0
    %623 = vmatpush1.msra.mxu0 0.0
    %624 = vmatprep.subr.mxu0 0.0
    %625 = vmatpush1.msra.mxu0 0.0
    %626 = vmatprep.subr.mxu0 0.0
    %627 = vmatpush1.msra.mxu0 0.0
    %628 = vmatprep.subr.mxu0 0.0
    %629 = vmatpush1.msra.mxu0 0.0
    %630 = vmatprep.subr.mxu0 0.0
    %631 = vmatpush1.msra.mxu0 0.0
    %632 = vmatprep.subr.mxu0 0.0
    %633 = vmatpush1.msra.mxu0 0.0
    %634 = vmatprep.mubr.f32.mxu0 0.0
    %v635 = vand.u32 %v71, 4294901760
    %636 = vmatmul.mubr.f32.gmra.mrb[0].mxu0 %v635
    %v637 = vpop.f32.mrb[0].mxu0
    %v638 = vadd.f32 %v556, %v637
    %v639 = vpop.f32.mrb[0].mxu0
    %v640 = vadd.f32 %v558, %v639
    %641 = vdwg.mxu0
    %v642 = vand.u32 %v52, 4294901760
    %643 = vmatprep.subr.mxu0 %v642
    %v644 = vand.u32 %v51, 4294901760
    %645 = vmatpush1.msra.mxu0 %v644
    %v646 = vand.u32 %v56, 4294901760
    %647 = vmatprep.subr.mxu0 %v646
    %v648 = vand.u32 %v55, 4294901760
    %649 = vmatpush1.msra.mxu0 %v648
    %v650 = vand.u32 %v60, 4294901760
    %651 = vmatprep.subr.mxu0 %v650
    %v652 = vand.u32 %v59, 4294901760
    %653 = vmatpush1.msra.mxu0 %v652
    %v654 = vand.u32 %v64, 4294901760
    %655 = vmatprep.subr.mxu0 %v654
    %v656 = vand.u32 %v63, 4294901760
    %657 = vmatpush1.msra.mxu0 %v656
    %v658 = vand.u32 %v68, 4294901760
    %659 = vmatprep.subr.mxu0 %v658
    %v660 = vand.u32 %v67, 4294901760
    %661 = vmatpush1.msra.mxu0 %v660
    %662 = vmatprep.subr.mxu0 0.0
    %663 = vmatpush1.msra.mxu0 0.0
    %664 = vmatprep.subr.mxu0 0.0
    %665 = vmatpush1.msra.mxu0 0.0
    %666 = vmatprep.subr.mxu0 0.0
    %667 = vmatpush1.msra.mxu0 0.0
    %668 = vmatprep.subr.mxu0 0.0
    %669 = vmatpush1.msra.mxu0 0.0
    %670 = vmatprep.subr.mxu0 0.0
    %671 = vmatpush1.msra.mxu0 0.0
    %672 = vmatprep.subr.mxu0 0.0
    %673 = vmatpush1.msra.mxu0 0.0
    %674 = vmatprep.subr.mxu0 0.0
    %675 = vmatpush1.msra.mxu0 0.0
    %676 = vmatprep.subr.mxu0 0.0
    %677 = vmatpush1.msra.mxu0 0.0
    %678 = vmatprep.subr.mxu0 0.0
    %679 = vmatpush1.msra.mxu0 0.0
    %680 = vmatprep.subr.mxu0 0.0
    %681 = vmatpush1.msra.mxu0 0.0
    %682 = vmatprep.subr.mxu0 0.0
    %683 = vmatpush1.msra.mxu0 0.0
    %684 = vmatprep.subr.mxu0 0.0
    %685 = vmatpush1.msra.mxu0 0.0
    %686 = vmatprep.subr.mxu0 0.0
    %687 = vmatpush1.msra.mxu0 0.0
    %688 = vmatprep.subr.mxu0 0.0
    %689 = vmatpush1.msra.mxu0 0.0
    %690 = vmatprep.subr.mxu0 0.0
    %691 = vmatpush1.msra.mxu0 0.0
    %692 = vmatprep.subr.mxu0 0.0
    %693 = vmatpush1.msra.mxu0 0.0
    %694 = vmatprep.subr.mxu0 0.0
    %695 = vmatpush1.msra.mxu0 0.0
    %696 = vmatprep.subr.mxu0 0.0
    %697 = vmatpush1.msra.mxu0 0.0
    %698 = vmatprep.subr.mxu0 0.0
    %699 = vmatpush1.msra.mxu0 0.0
    %700 = vmatprep.subr.mxu0 0.0
    %701 = vmatpush1.msra.mxu0 0.0
    %702 = vmatprep.subr.mxu0 0.0
    %703 = vmatpush1.msra.mxu0 0.0
    %704 = vmatprep.subr.mxu0 0.0
    %705 = vmatpush1.msra.mxu0 0.0
    %706 = vmatprep.subr.mxu0 0.0
    %707 = vmatpush1.msra.mxu0 0.0
    %708 = vmatprep.subr.mxu0 0.0
    %709 = vmatpush1.msra.mxu0 0.0
    %710 = vmatprep.subr.mxu0 0.0
    %711 = vmatpush1.msra.mxu0 0.0
    %712 = vmatprep.subr.mxu0 0.0
    %713 = vmatpush1.msra.mxu0 0.0
    %714 = vmatprep.subr.mxu0 0.0
    %715 = vmatpush1.msra.mxu0 0.0
    %716 = vmatprep.mubr.f32.mxu0 0.0
    %v717 = vand.u32 %v71, 4294901760
    %v718 = vsub.f32 %v71, %v717
    %v719 = vand.u32 %v718, 4294901760
    %v720 = vsub.f32 %v718, %v719
    %v721 = vand.u32 %v720, 4294901760
    %722 = vmatmul.mubr.f32.gmra.mrb[0].mxu0 %v721
    %v723 = vpop.f32.mrb[0].mxu0
    %v724 = vadd.f32 0.0, %v723
    %v725 = vpop.f32.mrb[0].mxu0
    %v726 = vadd.f32 0.0, %v725
    %727 = vdwg.mxu0
    %v728 = vand.u32 %v52, 4294901760
    %v729 = vsub.f32 %v52, %v728
    %v730 = vand.u32 %v729, 4294901760
    %v731 = vsub.f32 %v729, %v730
    %v732 = vand.u32 %v731, 4294901760
    %733 = vmatprep.subr.mxu0 %v732
    %v734 = vand.u32 %v51, 4294901760
    %v735 = vsub.f32 %v51, %v734
    %v736 = vand.u32 %v735, 4294901760
    %v737 = vsub.f32 %v735, %v736
    %v738 = vand.u32 %v737, 4294901760
    %739 = vmatpush1.msra.mxu0 %v738
    %v740 = vand.u32 %v56, 4294901760
    %v741 = vsub.f32 %v56, %v740
    %v742 = vand.u32 %v741, 4294901760
    %v743 = vsub.f32 %v741, %v742
    %v744 = vand.u32 %v743, 4294901760
    %745 = vmatprep.subr.mxu0 %v744
    %v746 = vand.u32 %v55, 4294901760
    %v747 = vsub.f32 %v55, %v746
    %v748 = vand.u32 %v747, 4294901760
    %v749 = vsub.f32 %v747, %v748
    %v750 = vand.u32 %v749, 4294901760
    %751 = vmatpush1.msra.mxu0 %v750
    %v752 = vand.u32 %v60, 4294901760
    %v753 = vsub.f32 %v60, %v752
    %v754 = vand.u32 %v753, 4294901760
    %v755 = vsub.f32 %v753, %v754
    %v756 = vand.u32 %v755, 4294901760
    %757 = vmatprep.subr.mxu0 %v756
    %v758 = vand.u32 %v59, 4294901760
    %v759 = vsub.f32 %v59, %v758
    %v760 = vand.u32 %v759, 4294901760
    %v761 = vsub.f32 %v759, %v760
    %v762 = vand.u32 %v761, 4294901760
    %763 = vmatpush1.msra.mxu0 %v762
    %v764 = vand.u32 %v64, 4294901760
    %v765 = vsub.f32 %v64, %v764
    %v766 = vand.u32 %v765, 4294901760
    %v767 = vsub.f32 %v765, %v766
    %v768 = vand.u32 %v767, 4294901760
    %769 = vmatprep.subr.mxu0 %v768
    %v770 = vand.u32 %v63, 4294901760
    %v771 = vsub.f32 %v63, %v770
    %v772 = vand.u32 %v771, 4294901760
    %v773 = vsub.f32 %v771, %v772
    %v774 = vand.u32 %v773, 4294901760
    %775 = vmatpush1.msra.mxu0 %v774
    %v776 = vand.u32 %v68, 4294901760
    %v777 = vsub.f32 %v68, %v776
    %v778 = vand.u32 %v777, 4294901760
    %v779 = vsub.f32 %v777, %v778
    %v780 = vand.u32 %v779, 4294901760
    %781 = vmatprep.subr.mxu0 %v780
    %v782 = vand.u32 %v67, 4294901760
    %v783 = vsub.f32 %v67, %v782
    %v784 = vand.u32 %v783, 4294901760
    %v785 = vsub.f32 %v783, %v784
    %v786 = vand.u32 %v785, 4294901760
    %787 = vmatpush1.msra.mxu0 %v786
    %788 = vmatprep.subr.mxu0 0.0
    %789 = vmatpush1.msra.mxu0 0.0
    %790 = vmatprep.subr.mxu0 0.0
    %791 = vmatpush1.msra.mxu0 0.0
    %792 = vmatprep.subr.mxu0 0.0
    %793 = vmatpush1.msra.mxu0 0.0
    %794 = vmatprep.subr.mxu0 0.0
    %795 = vmatpush1.msra.mxu0 0.0
    %796 = vmatprep.subr.mxu0 0.0
    %797 = vmatpush1.msra.mxu0 0.0
    %798 = vmatprep.subr.mxu0 0.0
    %799 = vmatpush1.msra.mxu0 0.0
    %800 = vmatprep.subr.mxu0 0.0
    %801 = vmatpush1.msra.mxu0 0.0
    %802 = vmatprep.subr.mxu0 0.0
    %803 = vmatpush1.msra.mxu0 0.0
    %804 = vmatprep.subr.mxu0 0.0
    %805 = vmatpush1.msra.mxu0 0.0
    %806 = vmatprep.subr.mxu0 0.0
    %807 = vmatpush1.msra.mxu0 0.0
    %808 = vmatprep.subr.mxu0 0.0
    %809 = vmatpush1.msra.mxu0 0.0
    %810 = vmatprep.subr.mxu0 0.0
    %811 = vmatpush1.msra.mxu0 0.0
    %812 = vmatprep.subr.mxu0 0.0
    %813 = vmatpush1.msra.mxu0 0.0
    %814 = vmatprep.subr.mxu0 0.0
    %815 = vmatpush1.msra.mxu0 0.0
    %816 = vmatprep.subr.mxu0 0.0
    %817 = vmatpush1.msra.mxu0 0.0
    %818 = vmatprep.subr.mxu0 0.0
    %819 = vmatpush1.msra.mxu0 0.0
    %820 = vmatprep.subr.mxu0 0.0
    %821 = vmatpush1.msra.mxu0 0.0
    %822 = vmatprep.subr.mxu0 0.0
    %823 = vmatpush1.msra.mxu0 0.0
    %824 = vmatprep.subr.mxu0 0.0
    %825 = vmatpush1.msra.mxu0 0.0
    %826 = vmatprep.subr.mxu0 0.0
    %827 = vmatpush1.msra.mxu0 0.0
    %828 = vmatprep.subr.mxu0 0.0
    %829 = vmatpush1.msra.mxu0 0.0
    %830 = vmatprep.subr.mxu0 0.0
    %831 = vmatpush1.msra.mxu0 0.0
    %832 = vmatprep.subr.mxu0 0.0
    %833 = vmatpush1.msra.mxu0 0.0
    %834 = vmatprep.subr.mxu0 0.0
    %835 = vmatpush1.msra.mxu0 0.0
    %836 = vmatprep.subr.mxu0 0.0
    %837 = vmatpush1.msra.mxu0 0.0
    %838 = vmatprep.subr.mxu0 0.0
    %839 = vmatpush1.msra.mxu0 0.0
    %840 = vmatprep.subr.mxu0 0.0
    %841 = vmatpush1.msra.mxu0 0.0
    %842 = vmatprep.mubr.f32.mxu0 0.0
    %v843 = vand.u32 %v71, 4294901760
    %844 = vmatmul.mubr.f32.gmra.mrb[0].mxu0 %v843
    %v845 = vpop.f32.mrb[0].mxu0
    %v846 = vadd.f32 %v724, %v845
    %v847 = vpop.f32.mrb[0].mxu0
    %v848 = vadd.f32 %v726, %v847
    %849 = vdwg.mxu0
    %v850 = vand.u32 %v52, 4294901760
    %v851 = vsub.f32 %v52, %v850
    %852 = vmatprep.subr.mxu0 %v851
    %v853 = vand.u32 %v51, 4294901760
    %v854 = vsub.f32 %v51, %v853
    %855 = vmatpush1.msra.mxu0 %v854
    %v856 = vand.u32 %v56, 4294901760
    %v857 = vsub.f32 %v56, %v856
    %858 = vmatprep.subr.mxu0 %v857
    %v859 = vand.u32 %v55, 4294901760
    %v860 = vsub.f32 %v55, %v859
    %861 = vmatpush1.msra.mxu0 %v860
    %v862 = vand.u32 %v60, 4294901760
    %v863 = vsub.f32 %v60, %v862
    %864 = vmatprep.subr.mxu0 %v863
    %v865 = vand.u32 %v59, 4294901760
    %v866 = vsub.f32 %v59, %v865
    %867 = vmatpush1.msra.mxu0 %v866
    %v868 = vand.u32 %v64, 4294901760
    %v869 = vsub.f32 %v64, %v868
    %870 = vmatprep.subr.mxu0 %v869
    %v871 = vand.u32 %v63, 4294901760
    %v872 = vsub.f32 %v63, %v871
    %873 = vmatpush1.msra.mxu0 %v872
    %v874 = vand.u32 %v68, 4294901760
    %v875 = vsub.f32 %v68, %v874
    %876 = vmatprep.subr.mxu0 %v875
    %v877 = vand.u32 %v67, 4294901760
    %v878 = vsub.f32 %v67, %v877
    %879 = vmatpush1.msra.mxu0 %v878
    %880 = vmatprep.subr.mxu0 0.0
    %881 = vmatpush1.msra.mxu0 0.0
    %882 = vmatprep.subr.mxu0 0.0
    %883 = vmatpush1.msra.mxu0 0.0
    %884 = vmatprep.subr.mxu0 0.0
    %885 = vmatpush1.msra.mxu0 0.0
    %886 = vmatprep.subr.mxu0 0.0
    %887 = vmatpush1.msra.mxu0 0.0
    %888 = vmatprep.subr.mxu0 0.0
    %889 = vmatpush1.msra.mxu0 0.0
    %890 = vmatprep.subr.mxu0 0.0
    %891 = vmatpush1.msra.mxu0 0.0
    %892 = vmatprep.subr.mxu0 0.0
    %893 = vmatpush1.msra.mxu0 0.0
    %894 = vmatprep.subr.mxu0 0.0
    %895 = vmatpush1.msra.mxu0 0.0
    %896 = vmatprep.subr.mxu0 0.0
    %897 = vmatpush1.msra.mxu0 0.0
    %898 = vmatprep.subr.mxu0 0.0
    %899 = vmatpush1.msra.mxu0 0.0
    %900 = vmatprep.subr.mxu0 0.0
    %901 = vmatpush1.msra.mxu0 0.0
    %902 = vmatprep.subr.mxu0 0.0
    %903 = vmatpush1.msra.mxu0 0.0
    %904 = vmatprep.subr.mxu0 0.0
    %905 = vmatpush1.msra.mxu0 0.0
    %906 = vmatprep.subr.mxu0 0.0
    %907 = vmatpush1.msra.mxu0 0.0
    %908 = vmatprep.subr.mxu0 0.0
    %909 = vmatpush1.msra.mxu0 0.0
    %910 = vmatprep.subr.mxu0 0.0
    %911 = vmatpush1.msra.mxu0 0.0
    %912 = vmatprep.subr.mxu0 0.0
    %913 = vmatpush1.msra.mxu0 0.0
    %914 = vmatprep.subr.mxu0 0.0
    %915 = vmatpush1.msra.mxu0 0.0
    %916 = vmatprep.subr.mxu0 0.0
    %917 = vmatpush1.msra.mxu0 0.0
    %918 = vmatprep.subr.mxu0 0.0
    %919 = vmatpush1.msra.mxu0 0.0
    %920 = vmatprep.subr.mxu0 0.0
    %921 = vmatpush1.msra.mxu0 0.0
    %922 = vmatprep.subr.mxu0 0.0
    %923 = vmatpush1.msra.mxu0 0.0
    %924 = vmatprep.subr.mxu0 0.0
    %925 = vmatpush1.msra.mxu0 0.0
    %926 = vmatprep.subr.mxu0 0.0
    %927 = vmatpush1.msra.mxu0 0.0
    %928 = vmatprep.subr.mxu0 0.0
    %929 = vmatpush1.msra.mxu0 0.0
    %930 = vmatprep.subr.mxu0 0.0
    %931 = vmatpush1.msra.mxu0 0.0
    %932 = vmatprep.subr.mxu0 0.0
    %933 = vmatpush1.msra.mxu0 0.0
    %934 = vmatprep.mubr.f32.mxu0 0.0
    %v935 = vand.u32 %v71, 4294901760
    %v936 = vsub.f32 %v71, %v935
    %937 = vmatmul.mubr.f32.gmra.mrb[0].mxu0 %v936
    %v938 = vpop.f32.mrb[0].mxu0
    %v939 = vadd.f32 %v846, %v938
    %v940 = vpop.f32.mrb[0].mxu0
    %v941 = vadd.f32 %v848, %v940
    %942 = vdwg.mxu0
    %v943 = vand.u32 %v52, 4294901760
    %944 = vmatprep.subr.mxu0 %v943
    %v945 = vand.u32 %v51, 4294901760
    %946 = vmatpush1.msra.mxu0 %v945
    %v947 = vand.u32 %v56, 4294901760
    %948 = vmatprep.subr.mxu0 %v947
    %v949 = vand.u32 %v55, 4294901760
    %950 = vmatpush1.msra.mxu0 %v949
    %v951 = vand.u32 %v60, 4294901760
    %952 = vmatprep.subr.mxu0 %v951
    %v953 = vand.u32 %v59, 4294901760
    %954 = vmatpush1.msra.mxu0 %v953
    %v955 = vand.u32 %v64, 4294901760
    %956 = vmatprep.subr.mxu0 %v955
    %v957 = vand.u32 %v63, 4294901760
    %958 = vmatpush1.msra.mxu0 %v957
    %v959 = vand.u32 %v68, 4294901760
    %960 = vmatprep.subr.mxu0 %v959
    %v961 = vand.u32 %v67, 4294901760
    %962 = vmatpush1.msra.mxu0 %v961
    %963 = vmatprep.subr.mxu0 0.0
    %964 = vmatpush1.msra.mxu0 0.0
    %965 = vmatprep.subr.mxu0 0.0
    %966 = vmatpush1.msra.mxu0 0.0
    %967 = vmatprep.subr.mxu0 0.0
    %968 = vmatpush1.msra.mxu0 0.0
    %969 = vmatprep.subr.mxu0 0.0
    %970 = vmatpush1.msra.mxu0 0.0
    %971 = vmatprep.subr.mxu0 0.0
    %972 = vmatpush1.msra.mxu0 0.0
    %973 = vmatprep.subr.mxu0 0.0
    %974 = vmatpush1.msra.mxu0 0.0
    %975 = vmatprep.subr.mxu0 0.0
    %976 = vmatpush1.msra.mxu0 0.0
    %977 = vmatprep.subr.mxu0 0.0
    %978 = vmatpush1.msra.mxu0 0.0
    %979 = vmatprep.subr.mxu0 0.0
    %980 = vmatpush1.msra.mxu0 0.0
    %981 = vmatprep.subr.mxu0 0.0
    %982 = vmatpush1.msra.mxu0 0.0
    %983 = vmatprep.subr.mxu0 0.0
    %984 = vmatpush1.msra.mxu0 0.0
    %985 = vmatprep.subr.mxu0 0.0
    %986 = vmatpush1.msra.mxu0 0.0
    %987 = vmatprep.subr.mxu0 0.0
    %988 = vmatpush1.msra.mxu0 0.0
    %989 = vmatprep.subr.mxu0 0.0
    %990 = vmatpush1.msra.mxu0 0.0
    %991 = vmatprep.subr.mxu0 0.0
    %992 = vmatpush1.msra.mxu0 0.0
    %993 = vmatprep.subr.mxu0 0.0
    %994 = vmatpush1.msra.mxu0 0.0
    %995 = vmatprep.subr.mxu0 0.0
    %996 = vmatpush1.msra.mxu0 0.0
    %997 = vmatprep.subr.mxu0 0.0
    %998 = vmatpush1.msra.mxu0 0.0
    %999 = vmatprep.subr.mxu0 0.0
    %1000 = vmatpush1.msra.mxu0 0.0
    %1001 = vmatprep.subr.mxu0 0.0
    %1002 = vmatpush1.msra.mxu0 0.0
    %1003 = vmatprep.subr.mxu0 0.0
    %1004 = vmatpush1.msra.mxu0 0.0
    %1005 = vmatprep.subr.mxu0 0.0
    %1006 = vmatpush1.msra.mxu0 0.0
    %1007 = vmatprep.subr.mxu0 0.0
    %1008 = vmatpush1.msra.mxu0 0.0
    %1009 = vmatprep.subr.mxu0 0.0
    %1010 = vmatpush1.msra.mxu0 0.0
    %1011 = vmatprep.subr.mxu0 0.0
    %1012 = vmatpush1.msra.mxu0 0.0
    %1013 = vmatprep.subr.mxu0 0.0
    %1014 = vmatpush1.msra.mxu0 0.0
    %1015 = vmatprep.subr.mxu0 0.0
    %1016 = vmatpush1.msra.mxu0 0.0
    %1017 = vmatprep.mubr.f32.mxu0 0.0
    %v1018 = vand.u32 %v71, 4294901760
    %v1019 = vsub.f32 %v71, %v1018
    %v1020 = vand.u32 %v1019, 4294901760
    %1021 = vmatmul.mubr.f32.gmra.mrb[0].mxu0 %v1020
    %v1022 = vpop.f32.mrb[0].mxu0
    %v1023 = vadd.f32 %v939, %v1022
    %v1024 = vpop.f32.mrb[0].mxu0
    %v1025 = vadd.f32 %v941, %v1024
    %1026 = vdwg.mxu0
    %v1027 = vand.u32 %v52, 4294901760
    %v1028 = vsub.f32 %v52, %v1027
    %v1029 = vand.u32 %v1028, 4294901760
    %1030 = vmatprep.subr.mxu0 %v1029
    %v1031 = vand.u32 %v51, 4294901760
    %v1032 = vsub.f32 %v51, %v1031
    %v1033 = vand.u32 %v1032, 4294901760
    %1034 = vmatpush1.msra.mxu0 %v1033
    %v1035 = vand.u32 %v56, 4294901760
    %v1036 = vsub.f32 %v56, %v1035
    %v1037 = vand.u32 %v1036, 4294901760
    %1038 = vmatprep.subr.mxu0 %v1037
    %v1039 = vand.u32 %v55, 4294901760
    %v1040 = vsub.f32 %v55, %v1039
    %v1041 = vand.u32 %v1040, 4294901760
    %1042 = vmatpush1.msra.mxu0 %v1041
    %v1043 = vand.u32 %v60, 4294901760
    %v1044 = vsub.f32 %v60, %v1043
    %v1045 = vand.u32 %v1044, 4294901760
    %1046 = vmatprep.subr.mxu0 %v1045
    %v1047 = vand.u32 %v59, 4294901760
    %v1048 = vsub.f32 %v59, %v1047
    %v1049 = vand.u32 %v1048, 4294901760
    %1050 = vmatpush1.msra.mxu0 %v1049
    %v1051 = vand.u32 %v64, 4294901760
    %v1052 = vsub.f32 %v64, %v1051
    %v1053 = vand.u32 %v1052, 4294901760
    %1054 = vmatprep.subr.mxu0 %v1053
    %v1055 = vand.u32 %v63, 4294901760
    %v1056 = vsub.f32 %v63, %v1055
    %v1057 = vand.u32 %v1056, 4294901760
    %1058 = vmatpush1.msra.mxu0 %v1057
    %v1059 = vand.u32 %v68, 4294901760
    %v1060 = vsub.f32 %v68, %v1059
    %v1061 = vand.u32 %v1060, 4294901760
    %1062 = vmatprep.subr.mxu0 %v1061
    %v1063 = vand.u32 %v67, 4294901760
    %v1064 = vsub.f32 %v67, %v1063
    %v1065 = vand.u32 %v1064, 4294901760
    %1066 = vmatpush1.msra.mxu0 %v1065
    %1067 = vmatprep.subr.mxu0 0.0
    %1068 = vmatpush1.msra.mxu0 0.0
    %1069 = vmatprep.subr.mxu0 0.0
    %1070 = vmatpush1.msra.mxu0 0.0
    %1071 = vmatprep.subr.mxu0 0.0
    %1072 = vmatpush1.msra.mxu0 0.0
    %1073 = vmatprep.subr.mxu0 0.0
    %1074 = vmatpush1.msra.mxu0 0.0
    %1075 = vmatprep.subr.mxu0 0.0
    %1076 = vmatpush1.msra.mxu0 0.0
    %1077 = vmatprep.subr.mxu0 0.0
    %1078 = vmatpush1.msra.mxu0 0.0
    %1079 = vmatprep.subr.mxu0 0.0
    %1080 = vmatpush1.msra.mxu0 0.0
    %1081 = vmatprep.subr.mxu0 0.0
    %1082 = vmatpush1.msra.mxu0 0.0
    %1083 = vmatprep.subr.mxu0 0.0
    %1084 = vmatpush1.msra.mxu0 0.0
    %1085 = vmatprep.subr.mxu0 0.0
    %1086 = vmatpush1.msra.mxu0 0.0
    %1087 = vmatprep.subr.mxu0 0.0
    %1088 = vmatpush1.msra.mxu0 0.0
    %1089 = vmatprep.subr.mxu0 0.0
    %1090 = vmatpush1.msra.mxu0 0.0
    %1091 = vmatprep.subr.mxu0 0.0
    %1092 = vmatpush1.msra.mxu0 0.0
    %1093 = vmatprep.subr.mxu0 0.0
    %1094 = vmatpush1.msra.mxu0 0.0
    %1095 = vmatprep.subr.mxu0 0.0
    %1096 = vmatpush1.msra.mxu0 0.0
    %1097 = vmatprep.subr.mxu0 0.0
    %1098 = vmatpush1.msra.mxu0 0.0
    %1099 = vmatprep.subr.mxu0 0.0
    %1100 = vmatpush1.msra.mxu0 0.0
    %1101 = vmatprep.subr.mxu0 0.0
    %1102 = vmatpush1.msra.mxu0 0.0
    %1103 = vmatprep.subr.mxu0 0.0
    %1104 = vmatpush1.msra.mxu0 0.0
    %1105 = vmatprep.subr.mxu0 0.0
    %1106 = vmatpush1.msra.mxu0 0.0
    %1107 = vmatprep.subr.mxu0 0.0
    %1108 = vmatpush1.msra.mxu0 0.0
    %1109 = vmatprep.subr.mxu0 0.0
    %1110 = vmatpush1.msra.mxu0 0.0
    %1111 = vmatprep.subr.mxu0 0.0
    %1112 = vmatpush1.msra.mxu0 0.0
    %1113 = vmatprep.subr.mxu0 0.0
    %1114 = vmatpush1.msra.mxu0 0.0
    %1115 = vmatprep.subr.mxu0 0.0
    %1116 = vmatpush1.msra.mxu0 0.0
    %1117 = vmatprep.subr.mxu0 0.0
    %1118 = vmatpush1.msra.mxu0 0.0
    %1119 = vmatprep.subr.mxu0 0.0
    %1120 = vmatpush1.msra.mxu0 0.0
    %1121 = vmatprep.mubr.f32.mxu0 0.0
    %v1122 = vand.u32 %v71, 4294901760
    %1123 = vmatmul.mubr.f32.gmra.mrb[0].mxu0 %v1122
    %v1124 = vpop.f32.mrb[0].mxu0
    %v1125 = vadd.f32 %v1023, %v1124
    %v1126 = vpop.f32.mrb[0].mxu0
    %v1127 = vadd.f32 %v1025, %v1126
    %1128 = vdwg.mxu0
    %v1129 = vand.u32 %v52, 4294901760
    %1130 = vmatprep.subr.mxu0 %v1129
    %v1131 = vand.u32 %v51, 4294901760
    %1132 = vmatpush1.msra.mxu0 %v1131
    %v1133 = vand.u32 %v56, 4294901760
    %1134 = vmatprep.subr.mxu0 %v1133
    %v1135 = vand.u32 %v55, 4294901760
    %1136 = vmatpush1.msra.mxu0 %v1135
    %v1137 = vand.u32 %v60, 4294901760
    %1138 = vmatprep.subr.mxu0 %v1137
    %v1139 = vand.u32 %v59, 4294901760
    %1140 = vmatpush1.msra.mxu0 %v1139
    %v1141 = vand.u32 %v64, 4294901760
    %1142 = vmatprep.subr.mxu0 %v1141
    %v1143 = vand.u32 %v63, 4294901760
    %1144 = vmatpush1.msra.mxu0 %v1143
    %v1145 = vand.u32 %v68, 4294901760
    %1146 = vmatprep.subr.mxu0 %v1145
    %v1147 = vand.u32 %v67, 4294901760
    %1148 = vmatpush1.msra.mxu0 %v1147
    %1149 = vmatprep.subr.mxu0 0.0
    %1150 = vmatpush1.msra.mxu0 0.0
    %1151 = vmatprep.subr.mxu0 0.0
    %1152 = vmatpush1.msra.mxu0 0.0
    %1153 = vmatprep.subr.mxu0 0.0
    %1154 = vmatpush1.msra.mxu0 0.0
    %1155 = vmatprep.subr.mxu0 0.0
    %1156 = vmatpush1.msra.mxu0 0.0
    %1157 = vmatprep.subr.mxu0 0.0
    %1158 = vmatpush1.msra.mxu0 0.0
    %1159 = vmatprep.subr.mxu0 0.0
    %1160 = vmatpush1.msra.mxu0 0.0
    %1161 = vmatprep.subr.mxu0 0.0
    %1162 = vmatpush1.msra.mxu0 0.0
    %1163 = vmatprep.subr.mxu0 0.0
    %1164 = vmatpush1.msra.mxu0 0.0
    %1165 = vmatprep.subr.mxu0 0.0
    %1166 = vmatpush1.msra.mxu0 0.0
    %1167 = vmatprep.subr.mxu0 0.0
    %1168 = vmatpush1.msra.mxu0 0.0
    %1169 = vmatprep.subr.mxu0 0.0
    %1170 = vmatpush1.msra.mxu0 0.0
    %1171 = vmatprep.subr.mxu0 0.0
    %1172 = vmatpush1.msra.mxu0 0.0
    %1173 = vmatprep.subr.mxu0 0.0
    %1174 = vmatpush1.msra.mxu0 0.0
    %1175 = vmatprep.subr.mxu0 0.0
    %1176 = vmatpush1.msra.mxu0 0.0
    %1177 = vmatprep.subr.mxu0 0.0
    %1178 = vmatpush1.msra.mxu0 0.0
    %1179 = vmatprep.subr.mxu0 0.0
    %1180 = vmatpush1.msra.mxu0 0.0
    %1181 = vmatprep.subr.mxu0 0.0
    %1182 = vmatpush1.msra.mxu0 0.0
    %1183 = vmatprep.subr.mxu0 0.0
    %1184 = vmatpush1.msra.mxu0 0.0
    %1185 = vmatprep.subr.mxu0 0.0
    %1186 = vmatpush1.msra.mxu0 0.0
    %1187 = vmatprep.subr.mxu0 0.0
    %1188 = vmatpush1.msra.mxu0 0.0
    %1189 = vmatprep.subr.mxu0 0.0
    %1190 = vmatpush1.msra.mxu0 0.0
    %1191 = vmatprep.subr.mxu0 0.0
    %1192 = vmatpush1.msra.mxu0 0.0
    %1193 = vmatprep.subr.mxu0 0.0
    %1194 = vmatpush1.msra.mxu0 0.0
    %1195 = vmatprep.subr.mxu0 0.0
    %1196 = vmatpush1.msra.mxu0 0.0
    %1197 = vmatprep.subr.mxu0 0.0
    %1198 = vmatpush1.msra.mxu0 0.0
    %1199 = vmatprep.subr.mxu0 0.0
    %1200 = vmatpush1.msra.mxu0 0.0
    %1201 = vmatprep.subr.mxu0 0.0
    %1202 = vmatpush1.msra.mxu0 0.0
    %1203 = vmatprep.mubr.f32.mxu0 0.0
    %v1204 = vand.u32 %v71, 4294901760
    %1205 = vmatmul.mubr.f32.gmra.mrb[0].mxu0 %v1204
    %v1206 = vpop.f32.mrb[0].mxu0
    %v1207 = vadd.f32 %v1125, %v1206
    %v1208 = vpop.f32.mrb[0].mxu0
    %v1209 = vadd.f32 %v1127, %v1208
    %1210 = vdwg.mxu0
    %1211 = vst [vmem:[#allocation7] sm:$0xff] %v638
    %1212 = vst [vmem:[#allocation7 + $0x8] sm:$0xff] %v640
    %1213 = vst [vmem:[#allocation7 + $0x10] sm:$0xff] %v1207
    %1214 = vst [vmem:[#allocation7 + $0x18] sm:$0xff] %v1209
    %v1215 = vld [vmem:[%s3] sm:$0xff]
    %v1216 = vadd.f32 %v638, %v640
    %v1217 = vadd.f32 %v1216, %v1207
    %v1218 = vadd.f32 %v1217, %v1209
    %1219 = vadd.xlane.f32.xlu0 %v1218
    %v1220 = vpop.xlane.xlu0 %1219
    %v1221 = vadd.f32 %v1215, %v1220
    %vm1222 = vcmask 7168
    %1223 = vst.msk [vmem:[%s3] sm:$0xff] %vm1222, %v1221
    %v1224 = vld [vmem:[%s4] sm:$0xff]
    %v1225 = vmul.f32 %v638, %v638
    %v1226 = vmul.f32 %v640, %v640
    %v1227 = vmul.f32 %v1207, %v1207
    %v1228 = vmul.f32 %v1209, %v1209
    %v1229 = vadd.f32 %v1225, %v1226
    %v1230 = vadd.f32 %v1229, %v1227
    %v1231 = vadd.f32 %v1230, %v1228
    %1232 = vadd.xlane.f32.xlu0 %v1231
    %v1233 = vpop.xlane.xlu0 %1232
    %v1234 = vadd.f32 %v1224, %v1233
    %1235 = vst.msk [vmem:[%s4] sm:$0xff] %vm1222, %v1234
    // Predicated region
    $region22: #{tpu_custom_call.1} parent=1 // pred_check
      _
    $region23: #{tpu_custom_call.1} parent=1 // pred_check_branch
      %1237 = sbr.rel (0) target = $region25
    $region24: #{tpu_custom_call.1} parent=1 // pred_region
      %s1239 = ssub.s32 512, 512
      %1240 = vsyncadd [#allocation4], %s1239
      %s1242 = sshll.u32 [#allocation7], 4
      %s1243 = int_to_ptr.vmem [resolvable:$true] %s1242
      %1245 = dma.vmem_to_hbm [thread:$0]  %s1243, 512, %s2, [#allocation4]
    $region25: #{tpu_custom_call.1} parent=1 // pred_fallthru
      _
    // Predicated region
    $region26: #{tpu_custom_call.1} parent=1 // pred_check
      _
    $region27: #{tpu_custom_call.1} parent=1 // pred_check_branch
      %1247 = sbr.rel (0) target = $region29
    $region28: #{tpu_custom_call.1} parent=1 // pred_region
      _
    $region29: #{tpu_custom_call.1} parent=1 // pred_fallthru
      _
    // Predicated region
    $region30: #{tpu_custom_call.1} parent=1 // pred_check
      _
    $region31: #{tpu_custom_call.1} parent=1 // pred_check_branch
      %1249 = sbr.rel (0) target = $region33
    $region32: #{tpu_custom_call.1} parent=1 // pred_region
      _
    $region33: #{tpu_custom_call.1} parent=1 // pred_fallthru
      _
    // Predicated region
    $region34: #{tpu_custom_call.1} parent=1 // pred_check
      _
    $region35: #{tpu_custom_call.1} parent=1 // pred_check_branch
      %1251 = sbr.rel (0) target = $region37
    $region36: #{tpu_custom_call.1} parent=1 // pred_region
      %1252 = dma.done [#allocation4], 512
    $region37: #{tpu_custom_call.1} parent=1 // pred_fallthru
      _
    // Predicated region
    $region38: #{tpu_custom_call.1} parent=1 // pred_check
      _
    $region39: #{tpu_custom_call.1} parent=1 // pred_check_branch
      %1254 = sbr.rel (0) target = $region41
    $region40: #{tpu_custom_call.1} parent=1 // pred_region
      _
    $region41: #{tpu_custom_call.1} parent=1 // pred_fallthru
      _
    // Predicated region
    $region42: #{tpu_custom_call.1} parent=1 // pred_check
      _
    $region43: #{tpu_custom_call.1} parent=1 // pred_check_branch
      %1256 = sbr.rel (0) target = $region45
    $region44: #{tpu_custom_call.1} parent=1 // pred_region
      _
    $region45: #{tpu_custom_call.1} parent=1 // pred_fallthru
      _
    %1257 = vsyncpa [#allocation3], 1
    %1258 = vsyncpa [#allocation6], 1
    %1259 = vsyncpa [#allocation4], 1

</llo_original>
